<compile_context>
chip_gen: v5e
topology: v5e:2x2
jax: 0.10.0
libtpu: 0.0.40
codegen_flags: <defaults>
</compile_context>

<pallas_src>
import functools
import math

import jax
import jax.numpy as jnp
from jax.experimental import pallas as pl
from jax.experimental.pallas import tpu as pltpu


# --------------------------------------------------------------------------
# Tiling / VMEM sizing helpers (all Python-int, trace-time).
# --------------------------------------------------------------------------
def _choose_hw_tile(C, HW, itemsize, target_bytes):
    """Lane (HW) tile: a multiple of 128 sized so one (C, T) slab is ~target_bytes,
    or the full HW extent when HW is small / not worth tiling."""
    if HW <= 128 or (HW % 128 != 0 and HW <= 512):
        return HW                                    # full-extent lane block (always legal)
    per_col = C * 128 * itemsize                     # bytes per 128-lane column
    want_cols = max(1, target_bytes // per_col)
    cols = HW // 128                                 # floor: keep T <= HW
    return 128 * int(min(cols, want_cols))


def _choose_batch_block(N, C, T, itemsize, target_bytes, nt):
    """Pack several batches per block when the HW axis alone cannot reach the byte
    target (small C and/or small HW). Returned Nb always divides N."""
    blk = C * T * itemsize
    if nt > 1 or N == 1 or blk >= target_bytes:
        return 1
    nb = int(min(N, max(1, target_bytes // blk)))
    if nb >= N and N >= 2:
        nb = max(1, N // 2)       # keep >=2 batch blocks for megacore (v7x) parallelism
    while N % nb:                 # keep batch blocks exact (no ragged leading dim)
        nb -= 1
    return nb


def _vmem_limit(per_step_bytes):
    """Double-buffered per-step footprint + headroom, capped well under v7x's 64 MiB."""
    need = 2 * per_step_bytes                        # double-buffered blocks
    need += need // 2 + (1 << 20)                    # compiler-internal scratch headroom
    return int(min(32 << 20, max(4 << 20, need)))


# --------------------------------------------------------------------------
# Kernel 1: global avg+max pool over HW, tiled along HW, output-resident accumulators.
# --------------------------------------------------------------------------
def _pool_kernel(ctxt_ref, sum_ref, max_ref, *, hw, tile, ragged):
    # ctxt_ref: (Nb, C, T)  one (batch-block, HW-tile) block, native dtype
    # sum_ref:  (Nb, C, 1)  running f32 sum (resident across the HW axis)
    # max_ref:  (Nb, C, 1)  running f32 max
    t = pl.program_id(1)
    x = ctxt_ref[...].astype(jnp.float32)            # per-tile upcast (no HBM f32 copy)

    if ragged:
        # Last HW tile extends past HW: mask out-of-bounds lanes.
        lane = jax.lax.broadcasted_iota(jnp.int32, x.shape, dimension=2)
        valid = (t * tile + lane) < hw
        xs = jnp.where(valid, x, 0.0)
        xm = jnp.where(valid, x, -jnp.inf)
    else:
        xs = x
        xm = x

    s = jnp.sum(xs, axis=2, keepdims=True)           # (Nb, C, 1)
    m = jnp.max(xm, axis=2, keepdims=True)           # (Nb, C, 1)

    @pl.when(t == 0)
    def _():
        sum_ref[...] = s
        max_ref[...] = m

    @pl.when(t > 0)
    def _():
        sum_ref[...] = sum_ref[...] + s
        max_ref[...] = jnp.maximum(max_ref[...], m)


# --------------------------------------------------------------------------
# Kernel 2: broadcast channel-attention scale, out = atten * sp (lane-dense stores).
# --------------------------------------------------------------------------
def _scale_kernel(atten_ref, sp_ref, out_ref):
    # atten_ref: (Nb, C, 1) f32;  sp_ref/out_ref: (Nb, C, T) in sp's dtype.
    a = atten_ref[...]                                # f32 gate
    x = sp_ref[...].astype(jnp.float32)               # f32 compute (v5e-safe for bf16)
    out_ref[...] = (x * a).astype(out_ref.dtype)      # cast only on store


# --------------------------------------------------------------------------
# Wrapper
# --------------------------------------------------------------------------
def cross_channel_attention_pallas(sp_nchw, ctxt_nchw, w1, w2, *,
                                   target_block_bytes=2 << 20):
    """sp/ctxt: (N, C, H, W). w1: (C//r, C, 1, 1), w2: (C, C//r, 1, 1) (PyTorch layout)."""
    N, C, H, W = sp_nchw.shape
    HW = H * W
    hidden = w1.shape[0]

    # NCHW -> (N, C, HW): reshape only (no HBM transpose); HW lands on the lane axis.
    sp = sp_nchw.reshape(N, C, HW)
    ctxt = ctxt_nchw.reshape(N, C, HW)                # native dtype; upcast per tile

    itemsize = jnp.dtype(ctxt.dtype).itemsize
    T = _choose_hw_tile(C, HW, itemsize, target_block_bytes)
    nt = pl.cdiv(HW, T)
    Nb = _choose_batch_block(N, C, T, itemsize, target_block_bytes, nt)
    n_batch_blocks = pl.cdiv(N, Nb)
    ragged_hw = (HW % T) != 0

    # --- Pass 1: pooled sum & max per (n, c), tiled & pipelined over HW. ---
    pool_step_bytes = Nb * C * T * itemsize + 2 * Nb * C * 4
    sum_nc1, max_nc1 = pl.pallas_call(
        functools.partial(_pool_kernel, hw=HW, tile=T, ragged=ragged_hw),
        out_shape=(jax.ShapeDtypeStruct((N, C, 1), jnp.float32),
                   jax.ShapeDtypeStruct((N, C, 1), jnp.float32)),
        grid_spec=pltpu.PrefetchScalarGridSpec(
            num_scalar_prefetch=0,
            grid=(n_batch_blocks, nt),
            in_specs=[pl.BlockSpec((Nb, C, T), lambda n, t: (n, 0, t))],
            out_specs=[pl.BlockSpec((Nb, C, 1), lambda n, t: (n, 0, 0)),
                       pl.BlockSpec((Nb, C, 1), lambda n, t: (n, 0, 0))],
        ),
        compiler_params=pltpu.CompilerParams(
            dimension_semantics=("parallel", "arbitrary"),
            vmem_limit_bytes=_vmem_limit(pool_step_bytes)),
    )(ctxt)

    avg = sum_nc1[:, :, 0] * (1.0 / HW)               # (N, C) f32
    mx = max_nc1[:, :, 0]                             # (N, C) f32

    # --- Tiny fc MLP + sigmoid hoisted to plain JAX (O(N*C*C/r), not worth a kernel). ---
    w1m = w1.reshape(hidden, C).astype(jnp.float32)   # (hidden, C)
    w2m = w2.reshape(C, hidden).astype(jnp.float32)   # (C, hidden)

    def fc(p):                                        # p: (N, C)
        h = jnp.maximum(p @ w1m.T, 0.0)               # (N, hidden)
        return h @ w2m.T                              # (N, C)

    atten = jax.nn.sigmoid(fc(avg) + fc(mx))          # (N, C), f32 gate
    atten = atten[:, :, None]                         # (N, C, 1), stays f32 until the multiply

    # --- Pass 2: out = atten * sp, fully parallel lane-dense elementwise. ---
    sp_itemsize = jnp.dtype(sp.dtype).itemsize
    scale_step_bytes = Nb * C * 4 + 2 * Nb * C * T * sp_itemsize
    out = pl.pallas_call(
        _scale_kernel,
        out_shape=jax.ShapeDtypeStruct((N, C, HW), sp.dtype),
        grid_spec=pltpu.PrefetchScalarGridSpec(
            num_scalar_prefetch=0,
            grid=(n_batch_blocks, nt),
            in_specs=[pl.BlockSpec((Nb, C, 1), lambda n, t: (n, 0, 0)),
                      pl.BlockSpec((Nb, C, T), lambda n, t: (n, 0, t))],
            out_specs=pl.BlockSpec((Nb, C, T), lambda n, t: (n, 0, t)),
        ),
        compiler_params=pltpu.CompilerParams(
            dimension_semantics=("parallel", "parallel"),
            vmem_limit_bytes=_vmem_limit(scale_step_bytes)),
    )(atten, sp)

    return out.reshape(N, C, H, W)


# --------------------------------------------------------------------------
# Pure-JAX reference mirroring the PyTorch forward.
# --------------------------------------------------------------------------
def _reference(sp, ctxt, w1, w2):
    hidden, C = w1.shape[0], w1.shape[1]
    w1m = w1.reshape(hidden, C)
    w2m = w2.reshape(C, hidden)
    avg = jnp.mean(ctxt, axis=(2, 3))                 # (N, C)
    mx = jnp.max(ctxt, axis=(2, 3))                   # (N, C)

    def fc(p):
        h = jnp.maximum(p @ w1m.T, 0.0)
        return h @ w2m.T

    atten = jax.nn.sigmoid(fc(avg) + fc(mx))          # (N, C)
    return atten[:, :, None, None] * sp


if __name__ == "__main__":
    ratio = 16                                        # module default; needs C >= 16
    key = jax.random.PRNGKey(0)

    test_shapes = [
        (2, 32, 16, 16),   # exact-divisor HW, lane-dense path
        (2, 32, 28, 28),   # HW=784: ragged last HW tile -> masked pool path
        (4, 32, 8, 8),     # small HW: multi-batch (Nb>1) blocks
    ]

    for (N, C, H, W) in test_shapes:
        hidden = C // ratio
        key, k_sp, k_ctxt, k1, k2 = jax.random.split(key, 5)

        sp = jax.random.normal(k_sp, (N, C, H, W), dtype=jnp.float32)
        ctxt = jax.random.normal(k_ctxt, (N, C, H, W), dtype=jnp.float32)

        # Conv2d init from the module: normal(0, sqrt(2 / (k*k*out_channels))), k=1.
        w1 = math.sqrt(2.0 / hidden) * jax.random.normal(k1, (hidden, C, 1, 1), jnp.float32)
        w2 = math.sqrt(2.0 / C) * jax.random.normal(k2, (C, hidden, 1, 1), jnp.float32)

        out = jax.block_until_ready(cross_channel_attention_pallas(sp, ctxt, w1, w2))
        ref = _reference(sp, ctxt, w1, w2)
        assert out.shape == (N, C, H, W)
        assert jnp.allclose(out, ref, atol=1e-4, rtol=1e-4), \
            f"mismatch vs reference at shape {(N, C, H, W)}"

    print("KERNEL_OK")
</pallas_src>

<mosaic_0001>
module attributes {stable_mosaic.version = 11 : i64} {
  func.func @_pool_kernel(%arg0: i32, %arg1: i32, %arg2: memref<1x32x256xf32, #tpu.memory_space<vmem>>, %arg3: memref<1x32x1xf32, #tpu.memory_space<vmem>>, %arg4: memref<1x32x1xf32, #tpu.memory_space<vmem>>) attributes {dimension_semantics = [#tpu.dimension_semantics<parallel>, #tpu.dimension_semantics<arbitrary>], iteration_bounds = array<i64: 2, 1>, scalar_prefetch = 0 : i64, scratch_operands = 0 : i64, tpu.core_type = #tpu.core_type<tc>, window_params = [{transform_indices = @transform_0, window_bounds = array<i64: 1, 32, 256>}, {transform_indices = @transform_1, window_bounds = array<i64: 1, 32, 1>}, {transform_indices = @transform_2, window_bounds = array<i64: 1, 32, 1>}]} {
    %c0 = arith.constant 0 : index
    %c0_0 = arith.constant 0 : index
    %c0_1 = arith.constant 0 : index
    %0 = vector.load %arg2[%c0, %c0_0, %c0_1] : memref<1x32x256xf32, #tpu.memory_space<vmem>>, vector<1x32x256xf32>
    %cst = arith.constant dense<0.000000e+00> : vector<1x32xf32>
    %1 = vector.multi_reduction <add>, %0, %cst [2] : vector<1x32x256xf32> to vector<1x32xf32>
    %2 = vector.shape_cast %1 : vector<1x32xf32> to vector<1x32x1xf32>
    %cst_2 = arith.constant dense<0xFF800000> : vector<1x32xf32>
    %3 = vector.multi_reduction <maximumf>, %0, %cst_2 [2] : vector<1x32x256xf32> to vector<1x32xf32>
    %4 = vector.shape_cast %3 : vector<1x32xf32> to vector<1x32x1xf32>
    %c0_i32 = arith.constant 0 : i32
    %5 = arith.cmpi eq, %arg1, %c0_i32 : i32
    %6 = arith.extui %5 : i1 to i32
    %c0_i32_3 = arith.constant 0 : i32
    %7 = arith.cmpi ne, %6, %c0_i32_3 : i32
    scf.if %7 {
      %c0_6 = arith.constant 0 : index
      %c0_7 = arith.constant 0 : index
      %c0_8 = arith.constant 0 : index
      %11 = vector.load %arg3[%c0_6, %c0_7, %c0_8] : memref<1x32x1xf32, #tpu.memory_space<vmem>>, vector<1x32x1xf32>
      tpu.vector_store %arg3[%c0_6, %c0_7, %c0_8], %2 {strides = array<i32>} : memref<1x32x1xf32, #tpu.memory_space<vmem>>, vector<1x32x1xf32>,
      %c0_9 = arith.constant 0 : index
      %c0_10 = arith.constant 0 : index
      %c0_11 = arith.constant 0 : index
      %12 = vector.load %arg4[%c0_9, %c0_10, %c0_11] : memref<1x32x1xf32, #tpu.memory_space<vmem>>, vector<1x32x1xf32>
      tpu.vector_store %arg4[%c0_9, %c0_10, %c0_11], %4 {strides = array<i32>} : memref<1x32x1xf32, #tpu.memory_space<vmem>>, vector<1x32x1xf32>,
    } else {
    }
    %c0_i32_4 = arith.constant 0 : i32
    %8 = arith.cmpi sgt, %arg1, %c0_i32_4 : i32
    %9 = arith.extui %8 : i1 to i32
    %c0_i32_5 = arith.constant 0 : i32
    %10 = arith.cmpi ne, %9, %c0_i32_5 : i32
    scf.if %10 {
      %c0_6 = arith.constant 0 : index
      %c0_7 = arith.constant 0 : index
      %c0_8 = arith.constant 0 : index
      %11 = vector.load %arg3[%c0_6, %c0_7, %c0_8] : memref<1x32x1xf32, #tpu.memory_space<vmem>>, vector<1x32x1xf32>
      %12 = arith.addf %11, %2 : vector<1x32x1xf32>
      %c0_9 = arith.constant 0 : index
      %c0_10 = arith.constant 0 : index
      %c0_11 = arith.constant 0 : index
      %13 = vector.load %arg3[%c0_9, %c0_10, %c0_11] : memref<1x32x1xf32, #tpu.memory_space<vmem>>, vector<1x32x1xf32>
      tpu.vector_store %arg3[%c0_9, %c0_10, %c0_11], %12 {strides = array<i32>} : memref<1x32x1xf32, #tpu.memory_space<vmem>>, vector<1x32x1xf32>,
      %c0_12 = arith.constant 0 : index
      %c0_13 = arith.constant 0 : index
      %c0_14 = arith.constant 0 : index
      %14 = vector.load %arg4[%c0_12, %c0_13, %c0_14] : memref<1x32x1xf32, #tpu.memory_space<vmem>>, vector<1x32x1xf32>
      %15 = arith.maximumf %14, %4 : vector<1x32x1xf32>
      %c0_15 = arith.constant 0 : index
      %c0_16 = arith.constant 0 : index
      %c0_17 = arith.constant 0 : index
      %16 = vector.load %arg4[%c0_15, %c0_16, %c0_17] : memref<1x32x1xf32, #tpu.memory_space<vmem>>, vector<1x32x1xf32>
      tpu.vector_store %arg4[%c0_15, %c0_16, %c0_17], %15 {strides = array<i32>} : memref<1x32x1xf32, #tpu.memory_space<vmem>>, vector<1x32x1xf32>,
    } else {
    }
    return
  }
  func.func @transform_0(%arg0: i32, %arg1: i32) -> (i32, i32, i32) {
    %c0_i32 = arith.constant 0 : i32
    %c0_i32_0 = arith.constant 0 : i32
    return %arg0, %c0_i32, %arg1 : i32, i32, i32
  }
  func.func @transform_1(%arg0: i32, %arg1: i32) -> (i32, i32, i32) {
    %c0_i32 = arith.constant 0 : i32
    %c0_i32_0 = arith.constant 0 : i32
    %c0_i32_1 = arith.constant 0 : i32
    return %arg0, %c0_i32, %c0_i32_0 : i32, i32, i32
  }
  func.func @transform_2(%arg0: i32, %arg1: i32) -> (i32, i32, i32) {
    %c0_i32 = arith.constant 0 : i32
    %c0_i32_0 = arith.constant 0 : i32
    %c0_i32_1 = arith.constant 0 : i32
    return %arg0, %c0_i32, %c0_i32_0 : i32, i32, i32
  }
}

</mosaic_0001>

<llo_original>
// kernel: tpu_custom_call.1
$region0: #{tpu_custom_call.1}
  #allocation0 [shape = 'u32[]', space=smem, size = 0x4, offset = 0x4, fixed_abs, tag = 'smem constant byte address 0x4 - core index']
  #allocation1 [shape = 'u32[72,128]{1,0:T(1,128)}', space=vmem, size = 0x9000, scoped, tag = 'internal scratch']
  %s0 = inlined_call_operand.hbm [shape: f32[2,32,256], index: 0, kind: input, shape index: {}]
  %s1 = inlined_call_operand.vmem [shape: f32[2,32,1], index: 1, kind: output, shape index: {0}]
  %s2 = inlined_call_operand.vmem [shape: f32[2,32,1], index: 2, kind: output, shape index: {1}]
  %3 = xla_tuple %s1, %s2
  %s4 = sld [smem:[#allocation0]]
  $region57: #{tpu_custom_call.1} parent=0
    _
  %s6 = ssub.s32 1, %s4
  %s7 = scalar_select 0, %s6, %s4
  $region1: #{tpu_custom_call.1} parent=0
    #allocation2 [shape = 'u8[65536]{0}', space=vmem, size = 0x10000, scoped, tag = 'input window, operand 0']
    #allocation3 [shape = 's32[2]{0}', space=sflag, size = 0x8, scoped, tag = 'scoped memory for tpu_custom_call.1']
    %8 = vsyncpa [#allocation3], 0
    %s9 = scalar_lea.sflag [#allocation3], 1
    %10 = vsyncpa %s9, 0
    loop: start=0, step=1, limit=4
    $region2: #{tpu_custom_call.1} parent=1 // loop_pre_header
      _
    $region3: #{tpu_custom_call.1} parent=1 // loop_header
      %s12 = sphi 0, %s16
      %p13 = scmp.ge.s32.totalorder %s12, 4
      %s19 = sphi 0, %s31
      %s20 = sphi 0, %s27
      %s21 = sphi 0, %s19
      %s22 = sphi 0, %s20
      %s23 = sphi 0, %s21
      %s24 = sphi 0, %s22
      %s36 = sphi 0, %s38
      %s39 = sphi 0, %s36
      %s40 = sphi 0, %s39
      %s56 = sphi 0, %s40
      %s62 = sphi 0, %s64
      %s65 = sphi 0, %s62
      %s66 = sphi 0, %s65
      %s82 = sphi 0, %s66
      %s88 = sphi 0, %s90
      %s91 = sphi 0, %s88
      %s92 = sphi 0, %s91
      %s108 = sphi 0, %s92
    $region4: #{tpu_custom_call.1} parent=1 // loop_header_branch
      %15 = sbr.rel (%p13) target = $region8
    $region5: #{tpu_custom_call.1} parent=1 // loop_body
      %s17 = ssub.s32 %s12, 1
      %s18 = ssub.s32 %s12, 2
      %s25 = sadd.s32 1, %s20
      %p26 = scmp.ge.s32.totalorder %s25, 1
      %s27 = scalar_select %p26, 0, %s25
      %s28 = sadd.s32 1, %s19
      %s29 = scalar_select %p26, %s28, %s19
      %p30 = scmp.ge.s32.totalorder %s29, 2
      %s31 = scalar_select %p30, 0, %s29
      %s32 = ssub.s32 %s19, %s31
      %s33 = ssub.s32 %s20, %s27
      %s34 = sor.u32 %s32, %s33
      %p35 = scmp.eq.s32.totalorder %s34, 0
      %s37 = sadd.s32 %s36, 1
      %s38 = scalar_select %p35, %s36, %s37
      %p41 = pneg %p35
      %p42 = scmp.eq.s32.totalorder %s12, 1
      %p43 = por %p41, %p42
      %p44 = scmp.ne.s32.totalorder %s36, %s39
      %p45 = scmp.eq.s32.totalorder %s12, 0
      %p46 = por %p44, %p45
      %p47 = scmp.ne.s32.totalorder %s36, %s39
      %p48 = scmp.eq.s32.totalorder %s17, 1
      %p49 = por %p47, %p48
      %p50 = scmp.ne.s32.totalorder %s39, %s40
      %p51 = scmp.eq.s32.totalorder %s17, 0
      %p52 = por %p50, %p51
      %p53 = scmp.ne.s32.totalorder %s39, %s40
      %p54 = scmp.eq.s32.totalorder %s18, 1
      %p55 = por %p53, %p54
      %p57 = scmp.ne.s32.totalorder %s40, %s56
      %p58 = scmp.eq.s32.totalorder %s18, 0
      %p59 = por %p57, %p58
      %s60 = ssub.s32 %s19, %s31
      %p61 = scmp.eq.s32.totalorder %s60, 0
      %s63 = sadd.s32 %s62, 1
      %s64 = scalar_select %p61, %s62, %s63
      %p67 = pneg %p61
      %p68 = scmp.eq.s32.totalorder %s12, 1
      %p69 = por %p67, %p68
      %p70 = scmp.ne.s32.totalorder %s62, %s65
      %p71 = scmp.eq.s32.totalorder %s12, 0
      %p72 = por %p70, %p71
      %p73 = scmp.ne.s32.totalorder %s62, %s65
      %p74 = scmp.eq.s32.totalorder %s17, 1
      %p75 = por %p73, %p74
      %p76 = scmp.ne.s32.totalorder %s65, %s66
      %p77 = scmp.eq.s32.totalorder %s17, 0
      %p78 = por %p76, %p77
      %p79 = scmp.ne.s32.totalorder %s65, %s66
      %p80 = scmp.eq.s32.totalorder %s18, 1
      %p81 = por %p79, %p80
      %p83 = scmp.ne.s32.totalorder %s66, %s82
      %p84 = scmp.eq.s32.totalorder %s18, 0
      %p85 = por %p83, %p84
      %s86 = ssub.s32 %s19, %s31
      %p87 = scmp.eq.s32.totalorder %s86, 0
      %s89 = sadd.s32 %s88, 1
      %s90 = scalar_select %p87, %s88, %s89
      %p93 = pneg %p87
      %p94 = scmp.eq.s32.totalorder %s12, 1
      %p95 = por %p93, %p94
      %p96 = scmp.ne.s32.totalorder %s88, %s91
      %p97 = scmp.eq.s32.totalorder %s12, 0
      %p98 = por %p96, %p97
      %p99 = scmp.ne.s32.totalorder %s88, %s91
      %p100 = scmp.eq.s32.totalorder %s17, 1
      %p101 = por %p99, %p100
      %p102 = scmp.ne.s32.totalorder %s91, %s92
      %p103 = scmp.eq.s32.totalorder %s17, 0
      %p104 = por %p102, %p103
      %p105 = scmp.ne.s32.totalorder %s91, %s92
      %p106 = scmp.eq.s32.totalorder %s18, 1
      %p107 = por %p105, %p106
      %p109 = scmp.ne.s32.totalorder %s92, %s108
      %p110 = scmp.eq.s32.totalorder %s18, 0
      %p111 = por %p109, %p110
      %p112 = scmp.le.s32.totalorder 1, %s12
      %p113 = scmp.lt.s32.totalorder %s12, 3
      %p114 = pnand %p112, %p113
      %p115 = pneg %p114
      // Predicated region
      $region9: #{tpu_custom_call.1} parent=5 // pred_check
        _
      $region10: #{tpu_custom_call.1} parent=5 // pred_check_branch
        %117 = sbr.rel (%p114) target = $region12
      $region11: #{tpu_custom_call.1} parent=5 // pred_region
        %s118 = ssub.s32 %s12, 1
      $region12: #{tpu_custom_call.1} parent=5 // pred_fallthru
        _
      %p119 = scmp.lt.s32.totalorder %s12, 2
      // Predicated region
      $region13: #{tpu_custom_call.1} parent=5 // pred_check
        %p120 = pneg %p119
      $region14: #{tpu_custom_call.1} parent=5 // pred_check_branch
        %122 = sbr.rel (%p120) target = $region16
      $region15: #{tpu_custom_call.1} parent=5 // pred_region
        // Predicated region
        $region17: #{tpu_custom_call.1} parent=15 // pred_check
          %p123 = pneg %p46
        $region18: #{tpu_custom_call.1} parent=15 // pred_check_branch
          %125 = sbr.rel (%p123) target = $region20
        $region19: #{tpu_custom_call.1} parent=15 // pred_region
          %s126 = sand.u32 %s36, 1
          %s127 = scalar_lea.sflag [#allocation3], %s126
          %s128 = sand.u32 %s36, 1
          %s129 = smul.addr %s128, 64
          %s130 = scalar_lea.vmem [#allocation2], %s129
          %s131 = smul.u32 2, %s20
          %133 = vsyncadd %s127, 0
          %s134 = smul.addr %s19, 8
          %s135 = sadd.s32 %s131, %s134
          %s136 = smul.addr %s135, 8
          %s137 = scalar_lea.hbm %s0, %s136
          %s138 = sshll.u32 %s137, 4
          %s139 = int_to_ptr.hbm [resolvable:$true] %s138
          %s140 = sshll.u32 %s130, 4
          %s141 = int_to_ptr.vmem [resolvable:$true] %s140
          %146 = dma.hbm_to_vmem [thread:$0]  %s139, 1024, %s141, %s127, 256, 256, 16
        $region20: #{tpu_custom_call.1} parent=15 // pred_fallthru
          _
      $region16: #{tpu_custom_call.1} parent=5 // pred_fallthru
        _
      %p147 = scmp.le.s32.totalorder 1, %s12
      %p148 = scmp.lt.s32.totalorder %s12, 3
      %p149 = pnand %p147, %p148
      %p150 = pneg %p149
      // Predicated region
      $region21: #{tpu_custom_call.1} parent=5 // pred_check
        _
      $region22: #{tpu_custom_call.1} parent=5 // pred_check_branch
        %152 = sbr.rel (%p149) target = $region24
      $region23: #{tpu_custom_call.1} parent=5 // pred_region
        %s153 = ssub.s32 %s12, 1
        %s154 = sand.u32 %s39, 1
        %s155 = scalar_lea.sflag [#allocation3], %s154
        %s156 = sand.u32 %s39, 1
        %s157 = smul.addr %s156, 64
        %s158 = scalar_lea.vmem [#allocation2], %s157
        // Predicated region
        $region25: #{tpu_custom_call.1} parent=23 // pred_check
          %p159 = pneg %p52
        $region26: #{tpu_custom_call.1} parent=23 // pred_check_branch
          %161 = sbr.rel (%p159) target = $region28
        $region27: #{tpu_custom_call.1} parent=23 // pred_region
          %163 = dma.done %s155, 1024
        $region28: #{tpu_custom_call.1} parent=23 // pred_fallthru
          _
        %s164 = sand.u32 %s39, 1
        %s165 = scalar_lea.sflag [#allocation3], %s164
        %s166 = sand.u32 %s39, 1
        %s167 = smul.addr %s166, 64
        %s168 = scalar_lea.vmem [#allocation2], %s167
        %p169 = pneg %p52
        %p170 = pneg %p49
        %p171 = pneg %p78
        %p172 = pneg %p75
        %p173 = scmp.lt.s32.totalorder %s21, 1
        %s174 = scalar_select %p173, %s21, 1
        %s175 = smul.addr %s174, 4
        %s176 = smul.addr %s175, 8
        %s177 = scalar_lea.vmem %s1, %s176
        %p178 = pneg %p104
        %p179 = pneg %p101
        %p180 = scmp.lt.s32.totalorder %s21, 1
        %s181 = scalar_select %p180, %s21, 1
        %s182 = smul.addr %s181, 4
        %s183 = smul.addr %s182, 8
        %s184 = scalar_lea.vmem %s2, %s183
        %s185 = smul.u32 2, %s22
        %p186 = scmp.lt.s32.totalorder %s21, 1
        %s187 = scalar_select %p186, %s21, 1
        %s188 = smul.addr %s187, 4
        %s189 = smul.addr %s188, 8
        %s190 = scalar_lea.vmem %s1, %s189
        %p191 = scmp.lt.s32.totalorder %s21, 1
        %s192 = scalar_select %p191, %s21, 1
        %s193 = smul.addr %s192, 4
        %s194 = smul.addr %s193, 8
        %s195 = scalar_lea.vmem %s2, %s194
        %v196 = vld [vmem:[%s158] sm:$0xff]
        %v197 = vld [vmem:[%s158 + $0x8] sm:$0xff]
        %v198 = vld [vmem:[%s158 + $0x10] sm:$0xff]
        %v199 = vld [vmem:[%s158 + $0x18] sm:$0xff]
        %v200 = vld [vmem:[%s158 + $0x20] sm:$0xff]
        %v201 = vld [vmem:[%s158 + $0x28] sm:$0xff]
        %v202 = vld [vmem:[%s158 + $0x30] sm:$0xff]
        %v203 = vld [vmem:[%s158 + $0x38] sm:$0xff]
        %v204 = vadd.f32 %v196, %v197
        %205 = vadd.xlane.f32.xlu0 %v204
        %v206 = vpop.xlane.xlu0 %205
        %v207 = vadd.f32 %v198, %v199
        %208 = vadd.xlane.f32.xlu0 %v207
        %v209 = vpop.xlane.xlu0 %208
        %v210 = vadd.f32 %v200, %v201
        %211 = vadd.xlane.f32.xlu0 %v210
        %v212 = vpop.xlane.xlu0 %211
        %v213 = vadd.f32 %v202, %v203
        %214 = vadd.xlane.f32.xlu0 %v213
        %v215 = vpop.xlane.xlu0 %214
        %v216 = vmax.f32 %v196, %v197
        %217 = vmax.xlane.f32.xlu0 %v216
        %v218 = vpop.xlane.xlu0 %217
        %v219 = vmax.f32 %v198, %v199
        %220 = vmax.xlane.f32.xlu0 %v219
        %v221 = vpop.xlane.xlu0 %220
        %v222 = vmax.f32 %v200, %v201
        %223 = vmax.xlane.f32.xlu0 %v222
        %v224 = vpop.xlane.xlu0 %223
        %v225 = vmax.f32 %v202, %v203
        %226 = vmax.xlane.f32.xlu0 %v225
        %v227 = vpop.xlane.xlu0 %226
        %p228 = scmp.eq.s32.totalorder %s22, 0
        // Predicated region
        $region29: #{tpu_custom_call.1} parent=23 // pred_check
          %p229 = pneg %p228
        $region30: #{tpu_custom_call.1} parent=23 // pred_check_branch
          %231 = sbr.rel (%p229) target = $region32
        $region31: #{tpu_custom_call.1} parent=23 // pred_region
          %vm232 = vcmask 7168
          %233 = vst.msk [vmem:[%s190] sm:$0xff] %vm232, %v206
          %234 = vst.msk [vmem:[%s190 + $0x8] sm:$0xff] %vm232, %v209
          %235 = vst.msk [vmem:[%s190 + $0x10] sm:$0xff] %vm232, %v212
          %236 = vst.msk [vmem:[%s190 + $0x18] sm:$0xff] %vm232, %v215
          %237 = vst.msk [vmem:[%s195] sm:$0xff] %vm232, %v218
          %238 = vst.msk [vmem:[%s195 + $0x8] sm:$0xff] %vm232, %v221
          %239 = vst.msk [vmem:[%s195 + $0x10] sm:$0xff] %vm232, %v224
          %240 = vst.msk [vmem:[%s195 + $0x18] sm:$0xff] %vm232, %v227
        $region32: #{tpu_custom_call.1} parent=23 // pred_fallthru
          _
        %p241 = scmp.gt.s32.totalorder %s22, 0
        // Predicated region
        $region33: #{tpu_custom_call.1} parent=23 // pred_check
          %p242 = pneg %p241
        $region34: #{tpu_custom_call.1} parent=23 // pred_check_branch
          %244 = sbr.rel (%p242) target = $region36
        $region35: #{tpu_custom_call.1} parent=23 // pred_region
          %v245 = vld [vmem:[%s190] sm:$0xff]
          %v246 = vld [vmem:[%s190 + $0x8] sm:$0xff]
          %v247 = vld [vmem:[%s190 + $0x10] sm:$0xff]
          %v248 = vld [vmem:[%s190 + $0x18] sm:$0xff]
          %v249 = vadd.f32 %v245, %v206
          %v250 = vadd.f32 %v246, %v209
          %v251 = vadd.f32 %v247, %v212
          %v252 = vadd.f32 %v248, %v215
          %vm253 = vcmask 7168
          %254 = vst.msk [vmem:[%s190] sm:$0xff] %vm253, %v249
          %255 = vst.msk [vmem:[%s190 + $0x8] sm:$0xff] %vm253, %v250
          %256 = vst.msk [vmem:[%s190 + $0x10] sm:$0xff] %vm253, %v251
          %257 = vst.msk [vmem:[%s190 + $0x18] sm:$0xff] %vm253, %v252
          %v258 = vld [vmem:[%s195] sm:$0xff]
          %v259 = vld [vmem:[%s195 + $0x8] sm:$0xff]
          %v260 = vld [vmem:[%s195 + $0x10] sm:$0xff]
          %v261 = vld [vmem:[%s195 + $0x18] sm:$0xff]
          %v262 = vmax.f32 %v258, %v218
          %v263 = vmax.f32 %v259, %v221
          %v264 = vmax.f32 %v260, %v224
          %v265 = vmax.f32 %v261, %v227
          %266 = vst.msk [vmem:[%s195] sm:$0xff] %vm253, %v262
          %267 = vst.msk [vmem:[%s195 + $0x8] sm:$0xff] %vm253, %v263
          %268 = vst.msk [vmem:[%s195 + $0x10] sm:$0xff] %vm253, %v264
          %269 = vst.msk [vmem:[%s195 + $0x18] sm:$0xff] %vm253, %v265
        $region36: #{tpu_custom_call.1} parent=23 // pred_fallthru
          _
        %p270 = scmp.lt.s32.totalorder %s21, 1
        %s271 = scalar_select %p270, %s21, 1
        %s272 = smul.addr %s271, 4
        %s273 = smul.addr %s272, 8
        %s274 = scalar_lea.vmem %s1, %s273
        %p275 = scmp.lt.s32.totalorder %s21, 1
        %s276 = scalar_select %p275, %s21, 1
        %s277 = smul.addr %s276, 4
        %s278 = smul.addr %s277, 8
        %s279 = scalar_lea.vmem %s2, %s278
        // Predicated region
        $region37: #{tpu_custom_call.1} parent=23 // pred_check
          %p280 = pneg %p75
        $region38: #{tpu_custom_call.1} parent=23 // pred_check_branch
          %282 = sbr.rel (%p280) target = $region40
        $region39: #{tpu_custom_call.1} parent=23 // pred_region
          _
        $region40: #{tpu_custom_call.1} parent=23 // pred_fallthru
          _
        // Predicated region
        $region41: #{tpu_custom_call.1} parent=23 // pred_check
          %p283 = pneg %p101
        $region42: #{tpu_custom_call.1} parent=23 // pred_check_branch
          %285 = sbr.rel (%p283) target = $region44
        $region43: #{tpu_custom_call.1} parent=23 // pred_region
          _
        $region44: #{tpu_custom_call.1} parent=23 // pred_fallthru
          _
      $region24: #{tpu_custom_call.1} parent=5 // pred_fallthru
        _
      %p286 = scmp.le.s32.totalorder 2, %s12
      // Predicated region
      $region45: #{tpu_custom_call.1} parent=5 // pred_check
        %p287 = pneg %p286
      $region46: #{tpu_custom_call.1} parent=5 // pred_check_branch
        %289 = sbr.rel (%p287) target = $region48
      $region47: #{tpu_custom_call.1} parent=5 // pred_region
        %s290 = ssub.s32 %s12, 2
        // Predicated region
        $region49: #{tpu_custom_call.1} parent=47 // pred_check
          %p291 = pneg %p81
        $region50: #{tpu_custom_call.1} parent=47 // pred_check_branch
          %293 = sbr.rel (%p291) target = $region52
        $region51: #{tpu_custom_call.1} parent=47 // pred_region
          %p294 = scmp.lt.s32.totalorder %s23, 1
          %s295 = scalar_select %p294, %s23, 1
          %s296 = smul.addr %s295, 4
          %s297 = smul.addr %s296, 8
          %s298 = scalar_lea.vmem %s1, %s297
        $region52: #{tpu_custom_call.1} parent=47 // pred_fallthru
          _
        // Predicated region
        $region53: #{tpu_custom_call.1} parent=47 // pred_check
          %p299 = pneg %p107
        $region54: #{tpu_custom_call.1} parent=47 // pred_check_branch
          %301 = sbr.rel (%p299) target = $region56
        $region55: #{tpu_custom_call.1} parent=47 // pred_region
          %p302 = scmp.lt.s32.totalorder %s23, 1
          %s303 = scalar_select %p302, %s23, 1
          %s304 = smul.addr %s303, 4
          %s305 = smul.addr %s304, 8
          %s306 = scalar_lea.vmem %s2, %s305
        $region56: #{tpu_custom_call.1} parent=47 // pred_fallthru
          _
      $region48: #{tpu_custom_call.1} parent=5 // pred_fallthru
        _
    $region6: #{tpu_custom_call.1} parent=1 // loop_footer
      %s16 = sadd.s32 1, %s12
    $region7: #{tpu_custom_call.1} parent=1 // loop_footer_branch
      %11 = sbr.rel target = $region3
    $region8: #{tpu_custom_call.1} parent=1 // loop_exit
      _
    %307 = vsyncpa [#allocation3], 1
    %s308 = scalar_lea.sflag [#allocation3], 1
    %309 = vsyncpa %s308, 1

</llo_original>
